<compile_context>
chip_gen: v6e
topology: v6e:2x2x1
jax: 0.10.0
libtpu: 0.0.40
codegen_flags: <defaults>
</compile_context>

<pallas_src>
import functools

import jax
import jax.numpy as jnp
from jax.experimental import pallas as pl
from jax.experimental.pallas import tpu as pltpu


def _round_up(x, m):
    return ((x + m - 1) // m) * m


def _vmem_capacity_bytes():
    """Physical VMEM capacity (fallback: 128 MiB for v5e/v6e-class parts)."""
    try:
        info = pltpu.get_tpu_info()
        cap = getattr(info, "vmem_capacity_bytes", None)
        if cap:
            return int(cap)
    except Exception:
        pass
    return 128 * 1024 * 1024


def _bconv_kernel(x_ref, w_ref, b_ref, o_ref, *, ks, dilation, row_stride,
                  l_tile, c_pad, fuse_taps):
    """One (batch, L-tile) grid step.

    x_ref: (C_pad, X_len)         whole flattened padded image (+ zero tail)
    w_ref: (C_out, ks*ks*C_pad)   fused per-sample weight, K ordered (kh, kw, c)
    b_ref: (C_out, 1) f32         bias (zeros if absent)
    o_ref: (C_out, l_tile)        one lane-dense stride-1 output tile
    """
    base = pl.multiple_of(pl.program_id(1) * l_tile, 128)
    strip = l_tile + 128

    # Build the ks*ks shifted-window taps from lane-ALIGNED loads + pltpu.roll.
    taps = []
    for kh in range(ks):
        for kw in range(ks):
            off = kh * dilation * row_stride + kw * dilation
            q, r = divmod(off, 128)
            start = pl.multiple_of(base + q * 128, 128)      # aligned lane start
            if r == 0:
                tap = x_ref[:, pl.ds(start, l_tile)]
            else:
                sub = x_ref[:, pl.ds(start, strip)]           # aligned load
                # rolled[i] = sub[i + r] for i < l_tile (np.roll semantics).
                tap = pltpu.roll(sub, strip - r, axis=1)[:, :l_tile]
            taps.append(tap)                                  # (C_pad, l_tile)

    if fuse_taps:
        # v5e/v6e: one MXU matmul with K = ks*ks*C_pad (single result drain).
        patch = jnp.concatenate(taps, axis=0)                 # (K, l_tile)
        acc = jnp.dot(w_ref[...], patch, preferred_element_type=jnp.float32)
    else:
        # v7x: per-tap accumulation (MRB in-place accumulate), no (K, l_tile)
        # im2col patch materialized in VMEM.
        acc = jnp.zeros((o_ref.shape[0], l_tile), jnp.float32)
        for t_idx, tap in enumerate(taps):
            w_tap = w_ref[:, t_idx * c_pad:(t_idx + 1) * c_pad]
            acc = acc + jnp.dot(w_tap, tap, preferred_element_type=jnp.float32)

    acc = acc + b_ref[...]                                    # (C_out,1) f32 bias
    o_ref[...] = acc.astype(o_ref.dtype)


def batch_conv2d(x, weight, bias=None, *, stride=1, padding=0, dilation=1,
                 compute_dtype=None, l_tile_cap=None, tap_fusion="auto"):
    """JAX/Pallas equivalent of BatchConv2DLayer.forward.

    compute_dtype: optionally cast x/weight (e.g. jnp.bfloat16) for the MXU;
    accumulation/bias stay f32 and the result is cast back to the input dtype.
    tap_fusion: "auto" (per-generation), True (single fused matmul),
    False (per-tap accumulation).
    """
    B, C, H, W = x.shape
    Bw, O, Cw, KH, KW = weight.shape
    assert B == Bw, "dim=0 of x must be equal in size to dim=0 of weight"
    assert C == Cw and KH == KW, "weight shape mismatch"
    ks = KH

    out_dtype = x.dtype
    if compute_dtype is not None:
        x = x.astype(compute_dtype)
        weight = weight.astype(compute_dtype)
    cdtype = x.dtype
    itemsize = jnp.dtype(cdtype).itemsize

    vmem_cap = _vmem_capacity_bytes()
    if tap_fusion == "auto":
        # v7x (64 MiB VMEM, MRB in-place accumulate) -> per-tap; v5e/v6e -> fused.
        fuse_taps = vmem_cap > 64 * 1024 * 1024
    else:
        fuse_taps = bool(tap_fusion)

    # Channel pad to a sublane multiple so every tap is (8,128)-tile aligned.
    sub_mult = {4: 8, 2: 16, 1: 32}.get(itemsize, 8)
    C_pad = _round_up(C, sub_mult)

    Hp, Wp = H + 2 * padding, W + 2 * padding
    span = dilation * (ks - 1)
    Ho1, Wo1 = Hp - span, Wp - span            # stride-1 output extents
    assert Ho1 > 0 and Wo1 > 0, "kernel larger than (padded) input"

    L_total = Ho1 * Wp                         # flattened stride-1 output length
    max_off = span * Wp + span                 # largest tap offset
    K = ks * ks * C_pad

    # ---- choose a lane-dense L_tile that fits a per-generation VMEM budget ----
    if l_tile_cap is None:
        l_tile_cap = 4096 if vmem_cap >= 96 * 1024 * 1024 else 2048
    max_tile = min(_round_up(L_total, 128), _round_up(l_tile_cap, 128))
    budget = int(0.45 * vmem_cap)              # per-step budget incl. 2x buffers

    def footprint(lt):
        n_t = -(-L_total // lt)
        x_len_est = n_t * lt + max_off + 128
        fixed = (2 * C_pad * x_len_est * itemsize      # x block (double-buffered)
                 + 2 * O * K * itemsize + 2 * O * 4)   # weight + bias blocks
        per = (2 * O * lt * itemsize                   # output tile (2x buffers)
               + O * lt * 4                            # f32 accumulator
               + C_pad * (lt + 128) * itemsize)        # one tap strip in flight
        per += (K * lt * itemsize) if fuse_taps else (2 * C_pad * lt * itemsize)
        return fixed + per

    L_tile = max_tile
    while L_tile > 128 and footprint(L_tile) > budget:
        L_tile -= 128
    # TODO(synk): if even L_tile=128 overflows the budget (huge images), tile x
    # along output rows with manual double-buffered DMA (memory_space=pl.ANY +
    # pltpu.make_async_copy) instead of keeping the whole flattened image resident.

    n_tiles = -(-L_total // L_tile)
    L_pad = n_tiles * L_tile

    # ---- single merged pad: spatial pad + channel pad + flattened-tail pad ----
    X_need = L_pad + max_off + 128             # covers every aligned tap strip
    extra_rows = max(0, -(-(X_need - Hp * Wp) // Wp))
    Hp_ext = Hp + extra_rows
    X_len = Hp_ext * Wp
    x_pad = jnp.pad(x, ((0, 0), (0, C_pad - C),
                        (padding, padding + extra_rows), (padding, padding)))
    x_flat = x_pad.reshape(B, C_pad, X_len)

    # Fused weight: (B, C_out, ks*ks*C_pad), K ordered (kh, kw, c) to match the
    # in-kernel tap stacking.
    w_pad = jnp.pad(weight, ((0, 0), (0, 0), (0, C_pad - C), (0, 0), (0, 0)))
    w_r = jnp.transpose(w_pad, (0, 1, 3, 4, 2)).reshape(B, O, K)

    if bias is None:
        b_r = jnp.zeros((B, O, 1), jnp.float32)
    else:
        assert bias.shape[0] == B, \
            "dim=0 of bias must be equal in size to dim=0 of weight"
        b_r = bias.reshape(B, O, 1).astype(jnp.float32)

    kernel = functools.partial(
        _bconv_kernel, ks=ks, dilation=dilation, row_stride=Wp,
        l_tile=L_tile, c_pad=C_pad, fuse_taps=fuse_taps)

    vmem_limit = int(min(int(0.75 * vmem_cap),                  # headroom on v7x
                         max(32 * 1024 * 1024, int(1.25 * footprint(L_tile)))))

    cost = pl.CostEstimate(
        flops=int(2 * B * O * K * L_pad),
        transcendentals=0,
        bytes_accessed=int((x_flat.size + w_r.size + B * O * L_pad) * itemsize
                           + b_r.size * 4))

    out_flat = pl.pallas_call(
        kernel,
        out_shape=jax.ShapeDtypeStruct((B, O, L_pad), cdtype),
        grid=(B, n_tiles),
        in_specs=[
            pl.BlockSpec((None, C_pad, X_len), lambda b, t: (b, 0, 0)),
            pl.BlockSpec((None, O, K), lambda b, t: (b, 0, 0)),
            pl.BlockSpec((None, O, 1), lambda b, t: (b, 0, 0)),
        ],
        out_specs=pl.BlockSpec((None, O, L_tile), lambda b, t: (b, 0, t)),
        compiler_params=pltpu.CompilerParams(
            # Batch is the sharded axis (each core fetches each image once);
            # the tile axis reuses the resident x block.
            dimension_semantics=("parallel", "arbitrary"),
            vmem_limit_bytes=vmem_limit),
        cost_estimate=cost,
    )(x_flat, w_r, b_r)

    # Glue: drop the padded tail and the invalid wrap-around columns.
    out = out_flat[:, :, :L_total].reshape(B, O, Ho1, Wp)[:, :, :, :Wo1]
    if stride > 1:
        # TODO(synk): compute strided output rows directly in-kernel instead of
        # computing the full stride-1 result and subsampling (stride^2 waste).
        out = out[:, :, ::stride, ::stride]
    if out.dtype != out_dtype:
        out = out.astype(out_dtype)
    return out


def _reference(x, weight, bias, *, stride, padding, dilation):
    """Pure-JAX reference matching F.conv2d per batch element."""
    outs = []
    for b in range(x.shape[0]):
        o = jax.lax.conv_general_dilated(
            x[b:b + 1], weight[b],
            window_strides=(stride, stride),
            padding=[(padding, padding), (padding, padding)],
            rhs_dilation=(dilation, dilation),
            dimension_numbers=("NCHW", "OIHW", "NCHW"))[0]
        if bias is not None:
            o = o + bias[b][:, None, None]
        outs.append(o)
    return jnp.stack(outs)


if __name__ == "__main__":
    B, C_in, C_out, H, W, ks = 2, 4, 8, 16, 16, 3

    key = jax.random.PRNGKey(0)
    kx, kw_, kb = jax.random.split(key, 3)
    x = jax.random.normal(kx, (B, C_in, H, W), dtype=jnp.float32)
    weight = jax.random.normal(kw_, (B, C_out, C_in, ks, ks), dtype=jnp.float32) * 0.1
    bias = jax.random.normal(kb, (B, C_out), dtype=jnp.float32)

    # 1) default path (auto tap strategy), stride=1 / padding=0 / dilation=1.
    out = jax.block_until_ready(batch_conv2d(x, weight, bias))
    ref = _reference(x, weight, bias, stride=1, padding=0, dilation=1)
    assert out.shape == ref.shape, (out.shape, ref.shape)
    assert jnp.allclose(out, ref, atol=1e-4, rtol=1e-4), "mismatch vs reference"

    # 2) explicit per-tap accumulation path (v7x-style MRB accumulate).
    out_acc = jax.block_until_ready(batch_conv2d(x, weight, bias, tap_fusion=False))
    assert jnp.allclose(out_acc, ref, atol=1e-4, rtol=1e-4), "per-tap path mismatch"

    # 3) padding + dilation path.
    out_p = jax.block_until_ready(
        batch_conv2d(x, weight, bias, stride=1, padding=1, dilation=2))
    ref_p = _reference(x, weight, bias, stride=1, padding=1, dilation=2)
    assert out_p.shape == ref_p.shape, (out_p.shape, ref_p.shape)
    assert jnp.allclose(out_p, ref_p, atol=1e-4, rtol=1e-4), "padding path mismatch"

    # 4) bf16 compute path (f32 accumulation, result cast back to f32).
    out_bf = jax.block_until_ready(
        batch_conv2d(x, weight, bias, compute_dtype=jnp.bfloat16))
    assert out_bf.dtype == jnp.float32
    assert jnp.allclose(out_bf, ref, atol=5e-2, rtol=5e-2), "bf16 path mismatch"

    print("KERNEL_OK")
</pallas_src>

<mosaic_0001>
module attributes {stable_mosaic.version = 11 : i64} {
  func.func @_bconv_kernel(%arg0: i32, %arg1: i32, %arg2: memref<1x8x432xf32, #tpu.memory_space<vmem>>, %arg3: memref<1x8x72xf32, #tpu.memory_space<vmem>>, %arg4: memref<1x8x1xf32, #tpu.memory_space<vmem>>, %arg5: memref<1x8x256xf32, #tpu.memory_space<vmem>>) attributes {dimension_semantics = [#tpu.dimension_semantics<parallel>, #tpu.dimension_semantics<arbitrary>], iteration_bounds = array<i64: 2, 1>, scalar_prefetch = 0 : i64, scratch_operands = 0 : i64, tpu.core_type = #tpu.core_type<tc>, window_params = [{transform_indices = @transform_0, window_bounds = array<i64: 1, 8, 432>}, {transform_indices = @transform_1, window_bounds = array<i64: 1, 8, 72>}, {transform_indices = @transform_2, window_bounds = array<i64: 1, 8, 1>}, {transform_indices = @transform_3, window_bounds = array<i64: 1, 8, 256>}]} {
    %c256_i32 = arith.constant 256 : i32
    %0 = arith.muli %arg1, %c256_i32 : i32
    %1 = tpu.assume_multiple %0, 128 : i32
    %c0_i32 = arith.constant 0 : i32
    %2 = arith.addi %1, %c0_i32 : i32
    %3 = tpu.assume_multiple %2, 128 : i32
    %c0 = arith.constant 0 : index
    %c0_0 = arith.constant 0 : index
    %4 = arith.index_cast %3 : i32 to index
    %5 = vector.load %arg2[%c0, %c0_0, %4] : memref<1x8x432xf32, #tpu.memory_space<vmem>>, vector<1x8x256xf32>
    %6 = vector.shape_cast %5 : vector<1x8x256xf32> to vector<8x256xf32>
    %c0_i32_1 = arith.constant 0 : i32
    %7 = arith.addi %1, %c0_i32_1 : i32
    %8 = tpu.assume_multiple %7, 128 : i32
    %c0_2 = arith.constant 0 : index
    %c0_3 = arith.constant 0 : index
    %9 = arith.index_cast %8 : i32 to index
    %10 = vector.load %arg2[%c0_2, %c0_3, %9] : memref<1x8x432xf32, #tpu.memory_space<vmem>>, vector<1x8x384xf32>
    %11 = vector.shape_cast %10 : vector<1x8x384xf32> to vector<8x384xf32>
    %c383_i32 = arith.constant 383 : i32
    %12 = tpu.dynamic_rotate %11 by %c383_i32 dim 1 : vector<8x384xf32>, i32 -> vector<8x384xf32>
    %13 = vector.extract_strided_slice %12 {offsets = [0, 0], sizes = [8, 256], strides = [1, 1]} : vector<8x384xf32> to vector<8x256xf32>
    %c0_i32_4 = arith.constant 0 : i32
    %14 = arith.addi %1, %c0_i32_4 : i32
    %15 = tpu.assume_multiple %14, 128 : i32
    %c0_5 = arith.constant 0 : index
    %c0_6 = arith.constant 0 : index
    %16 = arith.index_cast %15 : i32 to index
    %17 = vector.load %arg2[%c0_5, %c0_6, %16] : memref<1x8x432xf32, #tpu.memory_space<vmem>>, vector<1x8x384xf32>
    %18 = vector.shape_cast %17 : vector<1x8x384xf32> to vector<8x384xf32>
    %c382_i32 = arith.constant 382 : i32
    %19 = tpu.dynamic_rotate %18 by %c382_i32 dim 1 : vector<8x384xf32>, i32 -> vector<8x384xf32>
    %20 = vector.extract_strided_slice %19 {offsets = [0, 0], sizes = [8, 256], strides = [1, 1]} : vector<8x384xf32> to vector<8x256xf32>
    %c0_i32_7 = arith.constant 0 : i32
    %21 = arith.addi %1, %c0_i32_7 : i32
    %22 = tpu.assume_multiple %21, 128 : i32
    %c0_8 = arith.constant 0 : index
    %c0_9 = arith.constant 0 : index
    %23 = arith.index_cast %22 : i32 to index
    %24 = vector.load %arg2[%c0_8, %c0_9, %23] : memref<1x8x432xf32, #tpu.memory_space<vmem>>, vector<1x8x384xf32>
    %25 = vector.shape_cast %24 : vector<1x8x384xf32> to vector<8x384xf32>
    %c368_i32 = arith.constant 368 : i32
    %26 = tpu.dynamic_rotate %25 by %c368_i32 dim 1 : vector<8x384xf32>, i32 -> vector<8x384xf32>
    %27 = vector.extract_strided_slice %26 {offsets = [0, 0], sizes = [8, 256], strides = [1, 1]} : vector<8x384xf32> to vector<8x256xf32>
    %c0_i32_10 = arith.constant 0 : i32
    %28 = arith.addi %1, %c0_i32_10 : i32
    %29 = tpu.assume_multiple %28, 128 : i32
    %c0_11 = arith.constant 0 : index
    %c0_12 = arith.constant 0 : index
    %30 = arith.index_cast %29 : i32 to index
    %31 = vector.load %arg2[%c0_11, %c0_12, %30] : memref<1x8x432xf32, #tpu.memory_space<vmem>>, vector<1x8x384xf32>
    %32 = vector.shape_cast %31 : vector<1x8x384xf32> to vector<8x384xf32>
    %c367_i32 = arith.constant 367 : i32
    %33 = tpu.dynamic_rotate %32 by %c367_i32 dim 1 : vector<8x384xf32>, i32 -> vector<8x384xf32>
    %34 = vector.extract_strided_slice %33 {offsets = [0, 0], sizes = [8, 256], strides = [1, 1]} : vector<8x384xf32> to vector<8x256xf32>
    %c0_i32_13 = arith.constant 0 : i32
    %35 = arith.addi %1, %c0_i32_13 : i32
    %36 = tpu.assume_multiple %35, 128 : i32
    %c0_14 = arith.constant 0 : index
    %c0_15 = arith.constant 0 : index
    %37 = arith.index_cast %36 : i32 to index
    %38 = vector.load %arg2[%c0_14, %c0_15, %37] : memref<1x8x432xf32, #tpu.memory_space<vmem>>, vector<1x8x384xf32>
    %39 = vector.shape_cast %38 : vector<1x8x384xf32> to vector<8x384xf32>
    %c366_i32 = arith.constant 366 : i32
    %40 = tpu.dynamic_rotate %39 by %c366_i32 dim 1 : vector<8x384xf32>, i32 -> vector<8x384xf32>
    %41 = vector.extract_strided_slice %40 {offsets = [0, 0], sizes = [8, 256], strides = [1, 1]} : vector<8x384xf32> to vector<8x256xf32>
    %c0_i32_16 = arith.constant 0 : i32
    %42 = arith.addi %1, %c0_i32_16 : i32
    %43 = tpu.assume_multiple %42, 128 : i32
    %c0_17 = arith.constant 0 : index
    %c0_18 = arith.constant 0 : index
    %44 = arith.index_cast %43 : i32 to index
    %45 = vector.load %arg2[%c0_17, %c0_18, %44] : memref<1x8x432xf32, #tpu.memory_space<vmem>>, vector<1x8x384xf32>
    %46 = vector.shape_cast %45 : vector<1x8x384xf32> to vector<8x384xf32>
    %c352_i32 = arith.constant 352 : i32
    %47 = tpu.dynamic_rotate %46 by %c352_i32 dim 1 : vector<8x384xf32>, i32 -> vector<8x384xf32>
    %48 = vector.extract_strided_slice %47 {offsets = [0, 0], sizes = [8, 256], strides = [1, 1]} : vector<8x384xf32> to vector<8x256xf32>
    %c0_i32_19 = arith.constant 0 : i32
    %49 = arith.addi %1, %c0_i32_19 : i32
    %50 = tpu.assume_multiple %49, 128 : i32
    %c0_20 = arith.constant 0 : index
    %c0_21 = arith.constant 0 : index
    %51 = arith.index_cast %50 : i32 to index
    %52 = vector.load %arg2[%c0_20, %c0_21, %51] : memref<1x8x432xf32, #tpu.memory_space<vmem>>, vector<1x8x384xf32>
    %53 = vector.shape_cast %52 : vector<1x8x384xf32> to vector<8x384xf32>
    %c351_i32 = arith.constant 351 : i32
    %54 = tpu.dynamic_rotate %53 by %c351_i32 dim 1 : vector<8x384xf32>, i32 -> vector<8x384xf32>
    %55 = vector.extract_strided_slice %54 {offsets = [0, 0], sizes = [8, 256], strides = [1, 1]} : vector<8x384xf32> to vector<8x256xf32>
    %c0_i32_22 = arith.constant 0 : i32
    %56 = arith.addi %1, %c0_i32_22 : i32
    %57 = tpu.assume_multiple %56, 128 : i32
    %c0_23 = arith.constant 0 : index
    %c0_24 = arith.constant 0 : index
    %58 = arith.index_cast %57 : i32 to index
    %59 = vector.load %arg2[%c0_23, %c0_24, %58] : memref<1x8x432xf32, #tpu.memory_space<vmem>>, vector<1x8x384xf32>
    %60 = vector.shape_cast %59 : vector<1x8x384xf32> to vector<8x384xf32>
    %c350_i32 = arith.constant 350 : i32
    %61 = tpu.dynamic_rotate %60 by %c350_i32 dim 1 : vector<8x384xf32>, i32 -> vector<8x384xf32>
    %62 = vector.extract_strided_slice %61 {offsets = [0, 0], sizes = [8, 256], strides = [1, 1]} : vector<8x384xf32> to vector<8x256xf32>
    %63 = tpu.concatenate %6, %13, %20, %27, %34, %41, %48, %55, %62 in 0 : vector<8x256xf32>, vector<8x256xf32>, vector<8x256xf32>, vector<8x256xf32>, vector<8x256xf32>, vector<8x256xf32>, vector<8x256xf32>, vector<8x256xf32>, vector<8x256xf32> -> vector<72x256xf32>
    %c0_25 = arith.constant 0 : index
    %c0_26 = arith.constant 0 : index
    %c0_27 = arith.constant 0 : index
    %64 = vector.load %arg3[%c0_25, %c0_26, %c0_27] : memref<1x8x72xf32, #tpu.memory_space<vmem>>, vector<1x8x72xf32>
    %65 = vector.shape_cast %64 : vector<1x8x72xf32> to vector<8x72xf32>
    %cst = arith.constant dense<0.000000e+00> : vector<8x256xf32>
    %66 = tpu.matmul %65, %63, %cst {dimension_numbers = #tpu.dot_dimension_numbers<[1], [0], [0], [1], [0, 0, 1, 1], [], []>} : vector<8x72xf32>, vector<72x256xf32>, vector<8x256xf32> -> vector<8x256xf32>
    %c0_28 = arith.constant 0 : index
    %c0_29 = arith.constant 0 : index
    %c0_30 = arith.constant 0 : index
    %67 = vector.load %arg4[%c0_28, %c0_29, %c0_30] : memref<1x8x1xf32, #tpu.memory_space<vmem>>, vector<1x8x1xf32>
    %68 = vector.shape_cast %67 : vector<1x8x1xf32> to vector<8x1xf32>
    %69 = vector.broadcast %68 : vector<8x1xf32> to vector<8x256xf32>
    %70 = arith.addf %66, %69 : vector<8x256xf32>
    %c0_31 = arith.constant 0 : index
    %c0_32 = arith.constant 0 : index
    %c0_33 = arith.constant 0 : index
    %71 = vector.load %arg5[%c0_31, %c0_32, %c0_33] : memref<1x8x256xf32, #tpu.memory_space<vmem>>, vector<1x8x256xf32>
    %72 = vector.shape_cast %71 : vector<1x8x256xf32> to vector<8x256xf32>
    %73 = vector.shape_cast %70 : vector<8x256xf32> to vector<1x8x256xf32>
    tpu.vector_store %arg5[%c0_31, %c0_32, %c0_33], %73 {strides = array<i32>} : memref<1x8x256xf32, #tpu.memory_space<vmem>>, vector<1x8x256xf32>,
    return
  }
  func.func @transform_0(%arg0: i32, %arg1: i32) -> (i32, i32, i32) {
    %c0_i32 = arith.constant 0 : i32
    %c0_i32_0 = arith.constant 0 : i32
    %c0_i32_1 = arith.constant 0 : i32
    return %arg0, %c0_i32, %c0_i32_0 : i32, i32, i32
  }
  func.func @transform_1(%arg0: i32, %arg1: i32) -> (i32, i32, i32) {
    %c0_i32 = arith.constant 0 : i32
    %c0_i32_0 = arith.constant 0 : i32
    %c0_i32_1 = arith.constant 0 : i32
    return %arg0, %c0_i32, %c0_i32_0 : i32, i32, i32
  }
  func.func @transform_2(%arg0: i32, %arg1: i32) -> (i32, i32, i32) {
    %c0_i32 = arith.constant 0 : i32
    %c0_i32_0 = arith.constant 0 : i32
    %c0_i32_1 = arith.constant 0 : i32
    return %arg0, %c0_i32, %c0_i32_0 : i32, i32, i32
  }
  func.func @transform_3(%arg0: i32, %arg1: i32) -> (i32, i32, i32) {
    %c0_i32 = arith.constant 0 : i32
    %c0_i32_0 = arith.constant 0 : i32
    return %arg0, %c0_i32, %arg1 : i32, i32, i32
  }
}

</mosaic_0001>

<llo_original>
// kernel: tpu_custom_call.1
$region0: #{tpu_custom_call.1}
  #allocation0 [shape = 'u32[]', space=smem, size = 0x4, offset = 0x4, fixed_abs, tag = 'smem constant byte address 0x4 - core index']
  #allocation1 [shape = 'u32[144,128]{1,0:T(1,128)}', space=vmem, size = 0x12000, scoped, tag = 'internal scratch']
  %s0 = inlined_call_operand.hbm [shape: f32[2,8,432], index: 0, kind: input, shape index: {}]
  %s1 = inlined_call_operand.vmem [shape: f32[2,8,72], index: 1, kind: input, shape index: {}]
  %s2 = inlined_call_operand.vmem [shape: f32[2,8,1], index: 2, kind: input, shape index: {}]
  %s3 = inlined_call_operand.hbm [shape: f32[2,8,256], index: 3, kind: output, shape index: {}]
  %s4 = sld [smem:[#allocation0]]
  $region49: #{tpu_custom_call.1} parent=0
    _
  %s6 = ssub.s32 1, %s4
  %s7 = scalar_select 0, %s6, %s4
  $region1: #{tpu_custom_call.1} parent=0
    #allocation2 [shape = 'u8[32768]{0}', space=vmem, size = 0x8000, scoped, tag = 'input window, operand 0']
    #allocation3 [shape = 's32[2]{0}', space=sflag, size = 0x8, scoped, tag = 'scoped memory for tpu_custom_call.1']
    #allocation4 [shape = 's32[2]{0}', space=sflag, size = 0x8, scoped, tag = 'scoped memory for tpu_custom_call.1']
    #allocation5 [shape = 'u8[16384]{0}', space=vmem, size = 0x4000, scoped, tag = 'output window, operand 0']
    %8 = vsyncpa [#allocation3], 0
    %s9 = scalar_lea.sflag [#allocation3], 1
    %10 = vsyncpa %s9, 0
    %11 = vsyncpa [#allocation4], 0
    %s12 = scalar_lea.sflag [#allocation4], 1
    %13 = vsyncpa %s12, 0
    loop: start=0, step=1, limit=4
    $region2: #{tpu_custom_call.1} parent=1 // loop_pre_header
      _
    $region3: #{tpu_custom_call.1} parent=1 // loop_header
      %s15 = sphi 0, %s19
      %p16 = scmp.ge.s32.totalorder %s15, 4
      %s22 = sphi 0, %s34
      %s23 = sphi 0, %s30
      %s24 = sphi 0, %s22
      %s25 = sphi 0, %s23
      %s26 = sphi 0, %s24
      %s27 = sphi 0, %s25
      %s37 = sphi 0, %s39
      %s40 = sphi 0, %s37
      %s41 = sphi 0, %s40
      %s57 = sphi 0, %s41
      %s63 = sphi 0, %s65
      %s66 = sphi 0, %s63
      %s67 = sphi 0, %s66
      %s83 = sphi 0, %s67
      %s89 = sphi 0, %s91
      %s92 = sphi 0, %s89
      %s93 = sphi 0, %s92
      %s109 = sphi 0, %s93
      %s117 = sphi 0, %s119
      %s120 = sphi 0, %s117
      %s121 = sphi 0, %s120
      %s137 = sphi 0, %s121
    $region4: #{tpu_custom_call.1} parent=1 // loop_header_branch
      %18 = sbr.rel (%p16) target = $region8
    $region5: #{tpu_custom_call.1} parent=1 // loop_body
      %s20 = ssub.s32 %s15, 1
      %s21 = ssub.s32 %s15, 2
      %s28 = sadd.s32 1, %s23
      %p29 = scmp.ge.s32.totalorder %s28, 1
      %s30 = scalar_select %p29, 0, %s28
      %s31 = sadd.s32 1, %s22
      %s32 = scalar_select %p29, %s31, %s22
      %p33 = scmp.ge.s32.totalorder %s32, 2
      %s34 = scalar_select %p33, 0, %s32
      %s35 = ssub.s32 %s22, %s34
      %p36 = scmp.eq.s32.totalorder %s35, 0
      %s38 = sadd.s32 %s37, 1
      %s39 = scalar_select %p36, %s37, %s38
      %p42 = pneg %p36
      %p43 = scmp.eq.s32.totalorder %s15, 1
      %p44 = por %p42, %p43
      %p45 = scmp.ne.s32.totalorder %s37, %s40
      %p46 = scmp.eq.s32.totalorder %s15, 0
      %p47 = por %p45, %p46
      %p48 = scmp.ne.s32.totalorder %s37, %s40
      %p49 = scmp.eq.s32.totalorder %s20, 1
      %p50 = por %p48, %p49
      %p51 = scmp.ne.s32.totalorder %s40, %s41
      %p52 = scmp.eq.s32.totalorder %s20, 0
      %p53 = por %p51, %p52
      %p54 = scmp.ne.s32.totalorder %s40, %s41
      %p55 = scmp.eq.s32.totalorder %s21, 1
      %p56 = por %p54, %p55
      %p58 = scmp.ne.s32.totalorder %s41, %s57
      %p59 = scmp.eq.s32.totalorder %s21, 0
      %p60 = por %p58, %p59
      %s61 = ssub.s32 %s22, %s34
      %p62 = scmp.eq.s32.totalorder %s61, 0
      %s64 = sadd.s32 %s63, 1
      %s65 = scalar_select %p62, %s63, %s64
      %p68 = pneg %p62
      %p69 = scmp.eq.s32.totalorder %s15, 1
      %p70 = por %p68, %p69
      %p71 = scmp.ne.s32.totalorder %s63, %s66
      %p72 = scmp.eq.s32.totalorder %s15, 0
      %p73 = por %p71, %p72
      %p74 = scmp.ne.s32.totalorder %s63, %s66
      %p75 = scmp.eq.s32.totalorder %s20, 1
      %p76 = por %p74, %p75
      %p77 = scmp.ne.s32.totalorder %s66, %s67
      %p78 = scmp.eq.s32.totalorder %s20, 0
      %p79 = por %p77, %p78
      %p80 = scmp.ne.s32.totalorder %s66, %s67
      %p81 = scmp.eq.s32.totalorder %s21, 1
      %p82 = por %p80, %p81
      %p84 = scmp.ne.s32.totalorder %s67, %s83
      %p85 = scmp.eq.s32.totalorder %s21, 0
      %p86 = por %p84, %p85
      %s87 = ssub.s32 %s22, %s34
      %p88 = scmp.eq.s32.totalorder %s87, 0
      %s90 = sadd.s32 %s89, 1
      %s91 = scalar_select %p88, %s89, %s90
      %p94 = pneg %p88
      %p95 = scmp.eq.s32.totalorder %s15, 1
      %p96 = por %p94, %p95
      %p97 = scmp.ne.s32.totalorder %s89, %s92
      %p98 = scmp.eq.s32.totalorder %s15, 0
      %p99 = por %p97, %p98
      %p100 = scmp.ne.s32.totalorder %s89, %s92
      %p101 = scmp.eq.s32.totalorder %s20, 1
      %p102 = por %p100, %p101
      %p103 = scmp.ne.s32.totalorder %s92, %s93
      %p104 = scmp.eq.s32.totalorder %s20, 0
      %p105 = por %p103, %p104
      %p106 = scmp.ne.s32.totalorder %s92, %s93
      %p107 = scmp.eq.s32.totalorder %s21, 1
      %p108 = por %p106, %p107
      %p110 = scmp.ne.s32.totalorder %s93, %s109
      %p111 = scmp.eq.s32.totalorder %s21, 0
      %p112 = por %p110, %p111
      %s113 = ssub.s32 %s22, %s34
      %s114 = ssub.s32 %s23, %s30
      %s115 = sor.u32 %s113, %s114
      %p116 = scmp.eq.s32.totalorder %s115, 0
      %s118 = sadd.s32 %s117, 1
      %s119 = scalar_select %p116, %s117, %s118
      %p122 = pneg %p116
      %p123 = scmp.eq.s32.totalorder %s15, 1
      %p124 = por %p122, %p123
      %p125 = scmp.ne.s32.totalorder %s117, %s120
      %p126 = scmp.eq.s32.totalorder %s15, 0
      %p127 = por %p125, %p126
      %p128 = scmp.ne.s32.totalorder %s117, %s120
      %p129 = scmp.eq.s32.totalorder %s20, 1
      %p130 = por %p128, %p129
      %p131 = scmp.ne.s32.totalorder %s120, %s121
      %p132 = scmp.eq.s32.totalorder %s20, 0
      %p133 = por %p131, %p132
      %p134 = scmp.ne.s32.totalorder %s120, %s121
      %p135 = scmp.eq.s32.totalorder %s21, 1
      %p136 = por %p134, %p135
      %p138 = scmp.ne.s32.totalorder %s121, %s137
      %p139 = scmp.eq.s32.totalorder %s21, 0
      %p140 = por %p138, %p139
      %p141 = scmp.le.s32.totalorder 1, %s15
      %p142 = scmp.lt.s32.totalorder %s15, 3
      %p143 = pnand %p141, %p142
      %p144 = pneg %p143
      // Predicated region
      $region9: #{tpu_custom_call.1} parent=5 // pred_check
        _
      $region10: #{tpu_custom_call.1} parent=5 // pred_check_branch
        %146 = sbr.rel (%p143) target = $region12
      $region11: #{tpu_custom_call.1} parent=5 // pred_region
        %s147 = ssub.s32 %s15, 1
      $region12: #{tpu_custom_call.1} parent=5 // pred_fallthru
        _
      %p148 = scmp.lt.s32.totalorder %s15, 2
      // Predicated region
      $region13: #{tpu_custom_call.1} parent=5 // pred_check
        %p149 = pneg %p148
      $region14: #{tpu_custom_call.1} parent=5 // pred_check_branch
        %151 = sbr.rel (%p149) target = $region16
      $region15: #{tpu_custom_call.1} parent=5 // pred_region
        // Predicated region
        $region17: #{tpu_custom_call.1} parent=15 // pred_check
          %p152 = pneg %p47
        $region18: #{tpu_custom_call.1} parent=15 // pred_check_branch
          %154 = sbr.rel (%p152) target = $region20
        $region19: #{tpu_custom_call.1} parent=15 // pred_region
          %s155 = sand.u32 %s37, 1
          %s156 = scalar_lea.sflag [#allocation3], %s155
          %s157 = sand.u32 %s37, 1
          %s158 = smul.addr %s157, 32
          %s159 = scalar_lea.vmem [#allocation2], %s158
          %s161 = ssub.s32 512, 512
          %162 = vsyncadd %s156, %s161
          %s163 = smul.addr %s22, 4
          %s164 = smul.addr %s163, 128
          %s165 = scalar_lea.hbm %s0, %s164
          %s167 = sshll.u32 %s159, 4
          %s168 = int_to_ptr.vmem [resolvable:$true] %s167
          %170 = dma.hbm_to_vmem [thread:$0]  %s165, 512, %s168, %s156
        $region20: #{tpu_custom_call.1} parent=15 // pred_fallthru
          _
        // Predicated region
        $region21: #{tpu_custom_call.1} parent=15 // pred_check
          %p171 = pneg %p73
        $region22: #{tpu_custom_call.1} parent=15 // pred_check_branch
          %173 = sbr.rel (%p171) target = $region24
        $region23: #{tpu_custom_call.1} parent=15 // pred_region
          %p174 = scmp.lt.s32.totalorder %s22, 1
          %s175 = scalar_select %p174, %s22, 1
          %s176 = smul.addr %s175, 8
          %s177 = scalar_lea.vmem %s1, %s176
        $region24: #{tpu_custom_call.1} parent=15 // pred_fallthru
          _
        // Predicated region
        $region25: #{tpu_custom_call.1} parent=15 // pred_check
          %p178 = pneg %p99
        $region26: #{tpu_custom_call.1} parent=15 // pred_check_branch
          %180 = sbr.rel (%p178) target = $region28
        $region27: #{tpu_custom_call.1} parent=15 // pred_region
          %p181 = scmp.lt.s32.totalorder %s22, 1
          %s182 = scalar_select %p181, %s22, 1
          %s183 = smul.addr %s182, 8
          %s184 = scalar_lea.vmem %s2, %s183
        $region28: #{tpu_custom_call.1} parent=15 // pred_fallthru
          _
      $region16: #{tpu_custom_call.1} parent=5 // pred_fallthru
        _
      %p185 = scmp.le.s32.totalorder 1, %s15
      %p186 = scmp.lt.s32.totalorder %s15, 3
      %p187 = pnand %p185, %p186
      %p188 = pneg %p187
      // Predicated region
      $region29: #{tpu_custom_call.1} parent=5 // pred_check
        _
      $region30: #{tpu_custom_call.1} parent=5 // pred_check_branch
        %190 = sbr.rel (%p187) target = $region32
      $region31: #{tpu_custom_call.1} parent=5 // pred_region
        %s191 = ssub.s32 %s15, 1
        %s192 = sand.u32 %s40, 1
        %s193 = scalar_lea.sflag [#allocation3], %s192
        %s194 = sand.u32 %s40, 1
        %s195 = smul.addr %s194, 32
        %s196 = scalar_lea.vmem [#allocation2], %s195
        // Predicated region
        $region33: #{tpu_custom_call.1} parent=31 // pred_check
          %p197 = pneg %p53
        $region34: #{tpu_custom_call.1} parent=31 // pred_check_branch
          %199 = sbr.rel (%p197) target = $region36
        $region35: #{tpu_custom_call.1} parent=31 // pred_region
          %200 = dma.done %s193, 512
        $region36: #{tpu_custom_call.1} parent=31 // pred_fallthru
          _
        %s201 = sand.u32 %s40, 1
        %s202 = scalar_lea.sflag [#allocation3], %s201
        %s203 = sand.u32 %s40, 1
        %s204 = smul.addr %s203, 32
        %s205 = scalar_lea.vmem [#allocation2], %s204
        %p206 = pneg %p53
        %p207 = pneg %p50
        %p208 = scmp.lt.s32.totalorder %s24, 1
        %s209 = scalar_select %p208, %s24, 1
        %s210 = smul.addr %s209, 8
        %s211 = scalar_lea.vmem %s1, %s210
        %p212 = pneg %p79
        %p213 = pneg %p76
        %p214 = scmp.lt.s32.totalorder %s24, 1
        %s215 = scalar_select %p214, %s24, 1
        %s216 = smul.addr %s215, 8
        %s217 = scalar_lea.vmem %s2, %s216
        %p218 = pneg %p105
        %p219 = pneg %p102
        %p220 = pneg %p133
        %p221 = pneg %p130
        %s222 = sand.u32 %s120, 1
        %s223 = scalar_lea.sflag [#allocation4], %s222
        %s224 = sand.u32 %s120, 1
        %s225 = smul.addr %s224, 16
        %s226 = scalar_lea.vmem [#allocation5], %s225
        %p227 = scmp.lt.s32.totalorder %s24, 1
        %s228 = scalar_select %p227, %s24, 1
        %s229 = smul.addr %s228, 8
        %s230 = scalar_lea.vmem %s1, %s229
        %p231 = scmp.lt.s32.totalorder %s24, 1
        %s232 = scalar_select %p231, %s24, 1
        %s233 = smul.addr %s232, 8
        %s234 = scalar_lea.vmem %s2, %s233
        %s235 = smul.u32 2, %s25
        %s236 = smul.u32 %s25, 256
        %s237 = sshra.s32 %s236, 7
        %s238 = sand.u32 %s236, 127
        %s239 = smul.addr %s237, 8
        %s240 = scalar_lea.vmem %s196, %s239 [#allocation2]
        %v241 = vld [vmem:[%s240] sm:$0xff]
        %v242 = vld [vmem:[%s240 + $0x8] sm:$0xff]
        %v243 = vld [vmem:[%s240 + $0x10] sm:$0xff]
        %244 = vrot.lane.b32.xlu0 %v241, 127
        %v245 = vpop.permute.xlu0 %244
        %246 = vrot.lane.b32.xlu0 %v242, 127
        %v247 = vpop.permute.xlu0 %246
        %248 = vrot.lane.b32.xlu0 %v243, 127
        %v249 = vpop.permute.xlu0 %248
        %v250 = vlaneseq
        %v251 = vand.u32 %v250, 127
        %vm252 = vcmp.lt.s32.totalorder %v251, 127
        %v253 = vsel %vm252, %v247, %v249
        %v254 = vsel %vm252, %v245, %v247
        %255 = vrot.lane.b32.xlu0 %v241, 126
        %v256 = vpop.permute.xlu0 %255
        %257 = vrot.lane.b32.xlu0 %v242, 126
        %v258 = vpop.permute.xlu0 %257
        %259 = vrot.lane.b32.xlu0 %v243, 126
        %v260 = vpop.permute.xlu0 %259
        %vm261 = vcmp.lt.s32.totalorder %v251, 126
        %v262 = vsel %vm261, %v258, %v260
        %v263 = vsel %vm261, %v256, %v258
        %264 = vrot.lane.b32.xlu0 %v241, 112
        %v265 = vpop.permute.xlu0 %264
        %266 = vrot.lane.b32.xlu0 %v242, 112
        %v267 = vpop.permute.xlu0 %266
        %268 = vrot.lane.b32.xlu0 %v243, 112
        %v269 = vpop.permute.xlu0 %268
        %vm270 = vcmp.lt.s32.totalorder %v251, 112
        %v271 = vsel %vm270, %v267, %v269
        %v272 = vsel %vm270, %v265, %v267
        %273 = vrot.lane.b32.xlu0 %v241, 111
        %v274 = vpop.permute.xlu0 %273
        %275 = vrot.lane.b32.xlu0 %v242, 111
        %v276 = vpop.permute.xlu0 %275
        %277 = vrot.lane.b32.xlu0 %v243, 111
        %v278 = vpop.permute.xlu0 %277
        %vm279 = vcmp.lt.s32.totalorder %v251, 111
        %v280 = vsel %vm279, %v276, %v278
        %v281 = vsel %vm279, %v274, %v276
        %282 = vrot.lane.b32.xlu0 %v241, 110
        %v283 = vpop.permute.xlu0 %282
        %284 = vrot.lane.b32.xlu0 %v242, 110
        %v285 = vpop.permute.xlu0 %284
        %286 = vrot.lane.b32.xlu0 %v243, 110
        %v287 = vpop.permute.xlu0 %286
        %vm288 = vcmp.lt.s32.totalorder %v251, 110
        %v289 = vsel %vm288, %v285, %v287
        %v290 = vsel %vm288, %v283, %v285
        %291 = vrot.lane.b32.xlu0 %v241, 96
        %v292 = vpop.permute.xlu0 %291
        %293 = vrot.lane.b32.xlu0 %v242, 96
        %v294 = vpop.permute.xlu0 %293
        %295 = vrot.lane.b32.xlu0 %v243, 96
        %v296 = vpop.permute.xlu0 %295
        %vm297 = vcmp.lt.s32.totalorder %v251, 96
        %v298 = vsel %vm297, %v294, %v296
        %v299 = vsel %vm297, %v292, %v294
        %300 = vrot.lane.b32.xlu0 %v241, 95
        %v301 = vpop.permute.xlu0 %300
        %302 = vrot.lane.b32.xlu0 %v242, 95
        %v303 = vpop.permute.xlu0 %302
        %304 = vrot.lane.b32.xlu0 %v243, 95
        %v305 = vpop.permute.xlu0 %304
        %vm306 = vcmp.lt.s32.totalorder %v251, 95
        %v307 = vsel %vm306, %v303, %v305
        %v308 = vsel %vm306, %v301, %v303
        %309 = vrot.lane.b32.xlu0 %v241, 94
        %v310 = vpop.permute.xlu0 %309
        %311 = vrot.lane.b32.xlu0 %v242, 94
        %v312 = vpop.permute.xlu0 %311
        %313 = vrot.lane.b32.xlu0 %v243, 94
        %v314 = vpop.permute.xlu0 %313
        %vm315 = vcmp.lt.s32.totalorder %v251, 94
        %v316 = vsel %vm315, %v312, %v314
        %v317 = vsel %vm315, %v310, %v312
        %v318 = vld [vmem:[%s230] sm:$0xff]
        %v319 = vld [vmem:[%s234] sm:$0xff]
        %321 = vset.pattern.permute.xlu0 0
        %322 = vperm.xlu0 %321, %v319
        %v323 = vpop.permute.xlu0 %322
        %vm325 = vcmask 588800
        %v327 = vsel %vm325, %v318, 0
        %329 = vmatprep.subr.mxu0 0.0
        %330 = vmatpush1.msra.mxu0 0.0
        %331 = vmatprep.subr.mxu0 0.0
        %332 = vmatpush1.msra.mxu0 0.0
        %333 = vmatprep.subr.mxu0 0.0
        %334 = vmatpush1.msra.mxu0 0.0
        %335 = vmatprep.subr.mxu0 0.0
        %336 = vmatpush1.msra.mxu0 0.0
        %337 = vmatprep.subr.mxu0 0.0
        %338 = vmatpush1.msra.mxu0 0.0
        %339 = vmatprep.subr.mxu0 0.0
        %340 = vmatpush1.msra.mxu0 0.0
        %341 = vmatprep.subr.mxu0 0.0
        %342 = vmatpush1.msra.mxu0 0.0
        %343 = vmatprep.subr.mxu0 %v316
        %344 = vmatpush1.msra.mxu0 %v317
        %345 = vmatprep.subr.mxu0 %v307
        %346 = vmatpush1.msra.mxu0 %v308
        %347 = vmatprep.subr.mxu0 %v298
        %348 = vmatpush1.msra.mxu0 %v299
        %349 = vmatprep.subr.mxu0 %v289
        %350 = vmatpush1.msra.mxu0 %v290
        %351 = vmatprep.subr.mxu0 %v280
        %352 = vmatpush1.msra.mxu0 %v281
        %353 = vmatprep.subr.mxu0 %v271
        %354 = vmatpush1.msra.mxu0 %v272
        %355 = vmatprep.subr.mxu0 %v262
        %356 = vmatpush1.msra.mxu0 %v263
        %357 = vmatprep.subr.mxu0 %v253
        %358 = vmatpush1.msra.mxu0 %v254
        %359 = vmatprep.subr.mxu0 %v242
        %360 = vmatpush1.msra.mxu0 %v241
        %361 = vmatprep.subr.mxu0 0.0
        %362 = vmatpush2.msra.mxu0 0.0
        %363 = vmatprep.subr.mxu0 0.0
        %364 = vmatpush2.msra.mxu0 0.0
        %365 = vmatprep.subr.mxu0 0.0
        %366 = vmatpush2.msra.mxu0 0.0
        %367 = vmatprep.subr.mxu0 0.0
        %368 = vmatpush2.msra.mxu0 0.0
        %369 = vmatprep.subr.mxu0 0.0
        %370 = vmatpush2.msra.mxu0 0.0
        %371 = vmatprep.subr.mxu0 0.0
        %372 = vmatpush2.msra.mxu0 0.0
        %373 = vmatprep.subr.mxu0 0.0
        %374 = vmatpush2.msra.mxu0 0.0
        %375 = vmatprep.subr.mxu0 0.0
        %376 = vmatpush2.msra.mxu0 0.0
        %377 = vmatprep.subr.mxu0 0.0
        %378 = vmatpush2.msra.mxu0 0.0
        %379 = vmatprep.subr.mxu0 0.0
        %380 = vmatpush2.msra.mxu0 0.0
        %381 = vmatprep.subr.mxu0 0.0
        %382 = vmatpush2.msra.mxu0 0.0
        %383 = vmatprep.subr.mxu0 0.0
        %384 = vmatpush2.msra.mxu0 0.0
        %385 = vmatprep.subr.mxu0 0.0
        %386 = vmatpush2.msra.mxu0 0.0
        %387 = vmatprep.subr.mxu0 0.0
        %388 = vmatpush2.msra.mxu0 0.0
        %389 = vmatprep.subr.mxu0 0.0
        %390 = vmatpush2.msra.mxu0 0.0
        %391 = vmatprep.subr.mxu0 0.0
        %392 = vmatpush2.msra.mxu0 0.0
        %393 = vmatprep.mubr.f32.mxu0 0.0
        %394 = vmatmul.mubr.f32.gmra.mxu0 %v327
        %v395 = vpop.f32.mrf.mxu0
        %v396 = vadd.f32 %v323, %v395
        %v397 = vpop.f32.mrf.mxu0
        %v398 = vadd.f32 %v323, %v397
        %399 = vdwg.mxu0
        %400 = vst [vmem:[%s226] sm:$0xff] %v396
        %401 = vst [vmem:[%s226 + $0x8] sm:$0xff] %v398
        %s402 = sand.u32 %s120, 1
        %s403 = scalar_lea.sflag [#allocation4], %s402
        %s404 = sand.u32 %s120, 1
        %s405 = smul.addr %s404, 16
        %s406 = scalar_lea.vmem [#allocation5], %s405
        // Predicated region
        $region37: #{tpu_custom_call.1} parent=31 // pred_check
          %p407 = pneg %p130
        $region38: #{tpu_custom_call.1} parent=31 // pred_check_branch
          %409 = sbr.rel (%p407) target = $region40
        $region39: #{tpu_custom_call.1} parent=31 // pred_region
          %s410 = smul.u32 2, %s25
          %s412 = ssub.s32 256, 256
          %413 = vsyncadd %s403, %s412
          %s414 = smul.addr %s24, 2
          %s415 = sadd.s32 %s410, %s414
          %s416 = smul.addr %s415, 128
          %s417 = scalar_lea.hbm %s3, %s416
          %s419 = sshll.u32 %s406, 4
          %s420 = int_to_ptr.vmem [resolvable:$true] %s419
          %422 = dma.vmem_to_hbm [thread:$0]  %s420, 256, %s417, %s403
        $region40: #{tpu_custom_call.1} parent=31 // pred_fallthru
          _
      $region32: #{tpu_custom_call.1} parent=5 // pred_fallthru
        _
      %p423 = scmp.le.s32.totalorder 2, %s15
      // Predicated region
      $region41: #{tpu_custom_call.1} parent=5 // pred_check
        %p424 = pneg %p423
      $region42: #{tpu_custom_call.1} parent=5 // pred_check_branch
        %426 = sbr.rel (%p424) target = $region44
      $region43: #{tpu_custom_call.1} parent=5 // pred_region
        %s427 = ssub.s32 %s15, 2
        // Predicated region
        $region45: #{tpu_custom_call.1} parent=43 // pred_check
          %p428 = pneg %p136
        $region46: #{tpu_custom_call.1} parent=43 // pred_check_branch
          %430 = sbr.rel (%p428) target = $region48
        $region47: #{tpu_custom_call.1} parent=43 // pred_region
          %s431 = sand.u32 %s121, 1
          %s432 = scalar_lea.sflag [#allocation4], %s431
          %s433 = sand.u32 %s121, 1
          %s434 = smul.addr %s433, 16
          %s435 = scalar_lea.vmem [#allocation5], %s434
          %436 = dma.done %s432, 256
        $region48: #{tpu_custom_call.1} parent=43 // pred_fallthru
          _
      $region44: #{tpu_custom_call.1} parent=5 // pred_fallthru
        _
    $region6: #{tpu_custom_call.1} parent=1 // loop_footer
      %s19 = sadd.s32 1, %s15
    $region7: #{tpu_custom_call.1} parent=1 // loop_footer_branch
      %14 = sbr.rel target = $region3
    $region8: #{tpu_custom_call.1} parent=1 // loop_exit
      _
    %437 = vsyncpa [#allocation3], 1
    %s438 = scalar_lea.sflag [#allocation3], 1
    %439 = vsyncpa %s438, 1
    %440 = vsyncpa [#allocation4], 1
    %s441 = scalar_lea.sflag [#allocation4], 1
    %442 = vsyncpa %s441, 1

</llo_original>
